<compile_context>
chip_gen: v7x
topology: tpu7x:2x2x1
jax: 0.10.0
libtpu: 0.0.40
codegen_flags: <defaults>
</compile_context>

<pallas_src>
import functools

import jax
import jax.numpy as jnp
from jax import lax
from jax.experimental import pallas as pl
from jax.experimental.pallas import tpu as pltpu

EPS = 1e-5  # nn.InstanceNorm2d default eps


def _rblock_kernel(x_ref, masks_ref, w1_ref, w2_ref, o_ref, *, H, W, C):
    """Fused RBlock for one batch sample, (C, H*W) layout (H*W on lanes)."""
    HW = H * W
    f32 = jnp.float32

    x = x_ref[0].astype(f32)                    # (C, HW)
    masks = masks_ref[...].astype(f32)          # (2, HW)
    m_left = masks[0:1, :]                      # valid for column shift dw = -1
    m_right = masks[1:2, :]                     # valid for column shift dw = +1

    def shift(v, s):
        # result[:, p] = v[:, p + s] if 0 <= p + s < HW else 0   (static s)
        if s == 0:
            return v
        z = jnp.zeros((C, abs(s)), f32)
        if s > 0:
            return jnp.concatenate([v[:, s:], z], axis=1)
        return jnp.concatenate([z, v[:, :HW + s]], axis=1)

    def conv_instnorm(v, w_ref):
        # Column (dw) shifts with row-boundary masking; row (dh) shifts are
        # pure zero-fill lane shifts by +-W (no wrap possible).
        cols = [shift(v, -1) * m_left, v, shift(v, 1) * m_right]
        pieces = []
        for dh in (-1, 0, 1):                   # kh = dh + 1
            for col in cols:                    # kw = dw + 1
                pieces.append(shift(col, dh * W))
        patches = jnp.concatenate(pieces, axis=0)            # (9C, HW)

        # Single im2col matmul on the MXU (conv bias dropped: cancelled by IN).
        acc = jnp.dot(w_ref[...].astype(f32), patches,
                      preferred_element_type=f32)             # (C, HW)

        # InstanceNorm2d: per-channel over H*W, biased variance, no affine.
        s1 = jnp.sum(acc, axis=1, keepdims=True)
        s2 = jnp.sum(acc * acc, axis=1, keepdims=True)
        mean = s1 * (1.0 / HW)
        var = s2 * (1.0 / HW) - mean * mean
        return (acc - mean) * lax.rsqrt(var + EPS)

    h1 = jnp.maximum(conv_instnorm(x, w1_ref), 0.0)   # GBlock1: conv+IN+ReLU
    h2 = conv_instnorm(h1, w2_ref)                    # GBlock2: conv+IN
    o_ref[0] = (x + h2).astype(o_ref.dtype)           # residual, lane-dense store


@jax.jit
def rblock_forward(x_nchw, params):
    """RBlock forward.  x_nchw: (N, C, H, W) like PyTorch; returns (N, C, H, W)."""
    w1, b1, w2, b2 = params
    del b1, b2  # bias before affine-free InstanceNorm is a mathematical no-op
    N, C, H, W = x_nchw.shape
    HW = H * W

    # OIHW -> (Cout, 9*Cin) with row order (kh*3 + kw)*Cin + cin.
    w1_mat = jnp.transpose(w1, (0, 2, 3, 1)).reshape(C, 9 * C)
    w2_mat = jnp.transpose(w2, (0, 2, 3, 1)).reshape(C, 9 * C)

    # Free, contiguous reshape: keep NCHW ordering, flatten the spatial dims.
    x_flat = x_nchw.reshape(N, C, HW)

    # Row-boundary masks for the +-1 column shifts of the flattened image.
    w_idx = jnp.arange(HW, dtype=jnp.int32) % W
    masks = jnp.stack([(w_idx >= 1), (w_idx <= W - 2)], axis=0).astype(x_nchw.dtype)

    kernel = functools.partial(_rblock_kernel, H=H, W=W, C=C)
    out_flat = pl.pallas_call(
        kernel,
        out_shape=jax.ShapeDtypeStruct((N, C, HW), x_nchw.dtype),
        grid_spec=pltpu.PrefetchScalarGridSpec(
            num_scalar_prefetch=0,
            grid=(N,),
            in_specs=[
                pl.BlockSpec((1, C, HW), lambda n: (n, 0, 0)),   # one sample
                pl.BlockSpec((2, HW), lambda n: (0, 0)),         # boundary masks
                pl.BlockSpec((C, 9 * C), lambda n: (0, 0)),      # conv1 weights
                pl.BlockSpec((C, 9 * C), lambda n: (0, 0)),      # conv2 weights
            ],
            out_specs=pl.BlockSpec((1, C, HW), lambda n: (n, 0, 0)),
        ),
        compiler_params=pltpu.CompilerParams(
            dimension_semantics=("parallel",),   # batch across TCs on v7x
        ),
    )(x_flat, masks, w1_mat, w2_mat)
    return out_flat.reshape(N, C, H, W)


# ---------------------------- pure-JAX reference ----------------------------
def _instance_norm(x_nchw):
    mean = jnp.mean(x_nchw, axis=(2, 3), keepdims=True)
    var = jnp.mean((x_nchw - mean) ** 2, axis=(2, 3), keepdims=True)
    return (x_nchw - mean) * lax.rsqrt(var + EPS)


def rblock_reference(x_nchw, params):
    w1, b1, w2, b2 = params

    def conv(x, w, b):
        y = lax.conv_general_dilated(
            x, w, window_strides=(1, 1), padding=((1, 1), (1, 1)),
            dimension_numbers=("NCHW", "OIHW", "NCHW"),
        )
        return y + b[None, :, None, None]

    h = jnp.maximum(_instance_norm(conv(x_nchw, w1, b1)), 0.0)
    h = _instance_norm(conv(h, w2, b2))
    return x_nchw + h


# ---------------------------------- main ------------------------------------
if __name__ == "__main__":
    N, C, H, W = 2, 4, 16, 16

    key = jax.random.PRNGKey(0)
    kx, kw1, kb1, kw2, kb2 = jax.random.split(key, 5)

    x = jax.random.normal(kx, (N, C, H, W), dtype=jnp.float32)
    # Conv2d(channels, channels, kernel_size=3) parameter shapes (PyTorch OIHW).
    w1 = jax.random.normal(kw1, (C, C, 3, 3), dtype=jnp.float32) * 0.1
    b1 = jax.random.normal(kb1, (C,), dtype=jnp.float32) * 0.1
    w2 = jax.random.normal(kw2, (C, C, 3, 3), dtype=jnp.float32) * 0.1
    b2 = jax.random.normal(kb2, (C,), dtype=jnp.float32) * 0.1
    params = (w1, b1, w2, b2)

    out = jax.block_until_ready(rblock_forward(x, params))
    ref = jax.block_until_ready(rblock_reference(x, params))

    assert out.shape == (N, C, H, W) and out.dtype == jnp.float32
    assert jnp.allclose(out, ref, atol=1e-3, rtol=1e-3), (
        f"max abs err = {jnp.max(jnp.abs(out - ref))}"
    )
    print("KERNEL_OK")
</pallas_src>

<mosaic_0001>
module attributes {stable_mosaic.version = 11 : i64} {
  func.func @_rblock_kernel(%arg0: i32, %arg1: memref<1x4x256xf32, #tpu.memory_space<vmem>>, %arg2: memref<2x256xf32, #tpu.memory_space<vmem>>, %arg3: memref<4x36xf32, #tpu.memory_space<vmem>>, %arg4: memref<4x36xf32, #tpu.memory_space<vmem>>, %arg5: memref<1x4x256xf32, #tpu.memory_space<vmem>>) attributes {dimension_semantics = [#tpu.dimension_semantics<parallel>], iteration_bounds = array<i64: 2>, scalar_prefetch = 0 : i64, scratch_operands = 0 : i64, tpu.core_type = #tpu.core_type<tc>, window_params = [{transform_indices = @transform_0, window_bounds = array<i64: 1, 4, 256>}, {pipeline_mode = #tpu.pipeline_mode<synchronous>, transform_indices = @transform_1, window_bounds = array<i64: 2, 256>}, {pipeline_mode = #tpu.pipeline_mode<synchronous>, transform_indices = @transform_2, window_bounds = array<i64: 4, 36>}, {pipeline_mode = #tpu.pipeline_mode<synchronous>, transform_indices = @transform_3, window_bounds = array<i64: 4, 36>}, {transform_indices = @transform_4, window_bounds = array<i64: 1, 4, 256>}]} {
    %c0 = arith.constant 0 : index
    %c0_0 = arith.constant 0 : index
    %c0_1 = arith.constant 0 : index
    %0 = vector.load %arg1[%c0, %c0_0, %c0_1] : memref<1x4x256xf32, #tpu.memory_space<vmem>>, vector<1x4x256xf32>
    %1 = vector.shape_cast %0 : vector<1x4x256xf32> to vector<4x256xf32>
    %c0_2 = arith.constant 0 : index
    %c0_3 = arith.constant 0 : index
    %2 = vector.load %arg2[%c0_2, %c0_3] : memref<2x256xf32, #tpu.memory_space<vmem>>, vector<2x256xf32>
    %3 = vector.extract_strided_slice %2 {offsets = [0, 0], sizes = [1, 256], strides = [1, 1]} : vector<2x256xf32> to vector<1x256xf32>
    %4 = vector.extract_strided_slice %2 {offsets = [1, 0], sizes = [1, 256], strides = [1, 1]} : vector<2x256xf32> to vector<1x256xf32>
    %cst = arith.constant 0.000000e+00 : f32
    %5 = vector.broadcast %cst : f32 to vector<4x1xf32>
    %6 = vector.extract_strided_slice %1 {offsets = [0, 0], sizes = [4, 255], strides = [1, 1]} : vector<4x256xf32> to vector<4x255xf32>
    %7 = tpu.concatenate %5, %6 in 1 : vector<4x1xf32>, vector<4x255xf32> -> vector<4x256xf32>
    %8 = vector.broadcast %3 : vector<1x256xf32> to vector<4x256xf32>
    %9 = arith.mulf %7, %8 : vector<4x256xf32>
    %cst_4 = arith.constant 0.000000e+00 : f32
    %10 = vector.broadcast %cst_4 : f32 to vector<4x1xf32>
    %11 = vector.extract_strided_slice %1 {offsets = [0, 1], sizes = [4, 255], strides = [1, 1]} : vector<4x256xf32> to vector<4x255xf32>
    %12 = tpu.concatenate %11, %10 in 1 : vector<4x255xf32>, vector<4x1xf32> -> vector<4x256xf32>
    %13 = vector.broadcast %4 : vector<1x256xf32> to vector<4x256xf32>
    %14 = arith.mulf %12, %13 : vector<4x256xf32>
    %cst_5 = arith.constant 0.000000e+00 : f32
    %15 = vector.broadcast %cst_5 : f32 to vector<4x16xf32>
    %16 = vector.extract_strided_slice %9 {offsets = [0, 0], sizes = [4, 240], strides = [1, 1]} : vector<4x256xf32> to vector<4x240xf32>
    %17 = tpu.concatenate %15, %16 in 1 : vector<4x16xf32>, vector<4x240xf32> -> vector<4x256xf32>
    %cst_6 = arith.constant 0.000000e+00 : f32
    %18 = vector.broadcast %cst_6 : f32 to vector<4x16xf32>
    %19 = vector.extract_strided_slice %1 {offsets = [0, 0], sizes = [4, 240], strides = [1, 1]} : vector<4x256xf32> to vector<4x240xf32>
    %20 = tpu.concatenate %18, %19 in 1 : vector<4x16xf32>, vector<4x240xf32> -> vector<4x256xf32>
    %cst_7 = arith.constant 0.000000e+00 : f32
    %21 = vector.broadcast %cst_7 : f32 to vector<4x16xf32>
    %22 = vector.extract_strided_slice %14 {offsets = [0, 0], sizes = [4, 240], strides = [1, 1]} : vector<4x256xf32> to vector<4x240xf32>
    %23 = tpu.concatenate %21, %22 in 1 : vector<4x16xf32>, vector<4x240xf32> -> vector<4x256xf32>
    %cst_8 = arith.constant 0.000000e+00 : f32
    %24 = vector.broadcast %cst_8 : f32 to vector<4x16xf32>
    %25 = vector.extract_strided_slice %9 {offsets = [0, 16], sizes = [4, 240], strides = [1, 1]} : vector<4x256xf32> to vector<4x240xf32>
    %26 = tpu.concatenate %25, %24 in 1 : vector<4x240xf32>, vector<4x16xf32> -> vector<4x256xf32>
    %cst_9 = arith.constant 0.000000e+00 : f32
    %27 = vector.broadcast %cst_9 : f32 to vector<4x16xf32>
    %28 = vector.extract_strided_slice %1 {offsets = [0, 16], sizes = [4, 240], strides = [1, 1]} : vector<4x256xf32> to vector<4x240xf32>
    %29 = tpu.concatenate %28, %27 in 1 : vector<4x240xf32>, vector<4x16xf32> -> vector<4x256xf32>
    %cst_10 = arith.constant 0.000000e+00 : f32
    %30 = vector.broadcast %cst_10 : f32 to vector<4x16xf32>
    %31 = vector.extract_strided_slice %14 {offsets = [0, 16], sizes = [4, 240], strides = [1, 1]} : vector<4x256xf32> to vector<4x240xf32>
    %32 = tpu.concatenate %31, %30 in 1 : vector<4x240xf32>, vector<4x16xf32> -> vector<4x256xf32>
    %33 = tpu.concatenate %17, %20, %23, %9, %1, %14, %26, %29, %32 in 0 : vector<4x256xf32>, vector<4x256xf32>, vector<4x256xf32>, vector<4x256xf32>, vector<4x256xf32>, vector<4x256xf32>, vector<4x256xf32>, vector<4x256xf32>, vector<4x256xf32> -> vector<36x256xf32>
    %c0_11 = arith.constant 0 : index
    %c0_12 = arith.constant 0 : index
    %34 = vector.load %arg3[%c0_11, %c0_12] : memref<4x36xf32, #tpu.memory_space<vmem>>, vector<4x36xf32>
    %cst_13 = arith.constant dense<0.000000e+00> : vector<4x256xf32>
    %35 = tpu.matmul %34, %33, %cst_13 {dimension_numbers = #tpu.dot_dimension_numbers<[1], [0], [0], [1], [0, 0, 1, 1], [], []>} : vector<4x36xf32>, vector<36x256xf32>, vector<4x256xf32> -> vector<4x256xf32>
    %cst_14 = arith.constant dense<0.000000e+00> : vector<4xf32>
    %36 = vector.multi_reduction <add>, %35, %cst_14 [1] : vector<4x256xf32> to vector<4xf32>
    %37 = vector.shape_cast %36 : vector<4xf32> to vector<4x1xf32>
    %38 = arith.mulf %35, %35 : vector<4x256xf32>
    %cst_15 = arith.constant dense<0.000000e+00> : vector<4xf32>
    %39 = vector.multi_reduction <add>, %38, %cst_15 [1] : vector<4x256xf32> to vector<4xf32>
    %40 = vector.shape_cast %39 : vector<4xf32> to vector<4x1xf32>
    %cst_16 = arith.constant 3.906250e-03 : f32
    %41 = vector.broadcast %cst_16 : f32 to vector<4x1xf32>
    %42 = arith.mulf %37, %41 : vector<4x1xf32>
    %cst_17 = arith.constant 3.906250e-03 : f32
    %43 = vector.broadcast %cst_17 : f32 to vector<4x1xf32>
    %44 = arith.mulf %40, %43 : vector<4x1xf32>
    %45 = arith.mulf %42, %42 : vector<4x1xf32>
    %46 = arith.subf %44, %45 : vector<4x1xf32>
    %47 = vector.broadcast %42 : vector<4x1xf32> to vector<4x256xf32>
    %48 = arith.subf %35, %47 : vector<4x256xf32>
    %cst_18 = arith.constant 9.99999974E-6 : f32
    %49 = vector.broadcast %cst_18 : f32 to vector<4x1xf32>
    %50 = arith.addf %46, %49 : vector<4x1xf32>
    %51 = math.rsqrt %50 : vector<4x1xf32>
    %52 = vector.broadcast %51 : vector<4x1xf32> to vector<4x256xf32>
    %53 = arith.mulf %48, %52 : vector<4x256xf32>
    %cst_19 = arith.constant 0.000000e+00 : f32
    %54 = vector.broadcast %cst_19 : f32 to vector<4x256xf32>
    %55 = arith.maximumf %53, %54 : vector<4x256xf32>
    %cst_20 = arith.constant 0.000000e+00 : f32
    %56 = vector.broadcast %cst_20 : f32 to vector<4x1xf32>
    %57 = vector.extract_strided_slice %55 {offsets = [0, 0], sizes = [4, 255], strides = [1, 1]} : vector<4x256xf32> to vector<4x255xf32>
    %58 = tpu.concatenate %56, %57 in 1 : vector<4x1xf32>, vector<4x255xf32> -> vector<4x256xf32>
    %59 = vector.broadcast %3 : vector<1x256xf32> to vector<4x256xf32>
    %60 = arith.mulf %58, %59 : vector<4x256xf32>
    %cst_21 = arith.constant 0.000000e+00 : f32
    %61 = vector.broadcast %cst_21 : f32 to vector<4x1xf32>
    %62 = vector.extract_strided_slice %55 {offsets = [0, 1], sizes = [4, 255], strides = [1, 1]} : vector<4x256xf32> to vector<4x255xf32>
    %63 = tpu.concatenate %62, %61 in 1 : vector<4x255xf32>, vector<4x1xf32> -> vector<4x256xf32>
    %64 = vector.broadcast %4 : vector<1x256xf32> to vector<4x256xf32>
    %65 = arith.mulf %63, %64 : vector<4x256xf32>
    %cst_22 = arith.constant 0.000000e+00 : f32
    %66 = vector.broadcast %cst_22 : f32 to vector<4x16xf32>
    %67 = vector.extract_strided_slice %60 {offsets = [0, 0], sizes = [4, 240], strides = [1, 1]} : vector<4x256xf32> to vector<4x240xf32>
    %68 = tpu.concatenate %66, %67 in 1 : vector<4x16xf32>, vector<4x240xf32> -> vector<4x256xf32>
    %cst_23 = arith.constant 0.000000e+00 : f32
    %69 = vector.broadcast %cst_23 : f32 to vector<4x16xf32>
    %70 = vector.extract_strided_slice %55 {offsets = [0, 0], sizes = [4, 240], strides = [1, 1]} : vector<4x256xf32> to vector<4x240xf32>
    %71 = tpu.concatenate %69, %70 in 1 : vector<4x16xf32>, vector<4x240xf32> -> vector<4x256xf32>
    %cst_24 = arith.constant 0.000000e+00 : f32
    %72 = vector.broadcast %cst_24 : f32 to vector<4x16xf32>
    %73 = vector.extract_strided_slice %65 {offsets = [0, 0], sizes = [4, 240], strides = [1, 1]} : vector<4x256xf32> to vector<4x240xf32>
    %74 = tpu.concatenate %72, %73 in 1 : vector<4x16xf32>, vector<4x240xf32> -> vector<4x256xf32>
    %cst_25 = arith.constant 0.000000e+00 : f32
    %75 = vector.broadcast %cst_25 : f32 to vector<4x16xf32>
    %76 = vector.extract_strided_slice %60 {offsets = [0, 16], sizes = [4, 240], strides = [1, 1]} : vector<4x256xf32> to vector<4x240xf32>
    %77 = tpu.concatenate %76, %75 in 1 : vector<4x240xf32>, vector<4x16xf32> -> vector<4x256xf32>
    %cst_26 = arith.constant 0.000000e+00 : f32
    %78 = vector.broadcast %cst_26 : f32 to vector<4x16xf32>
    %79 = vector.extract_strided_slice %55 {offsets = [0, 16], sizes = [4, 240], strides = [1, 1]} : vector<4x256xf32> to vector<4x240xf32>
    %80 = tpu.concatenate %79, %78 in 1 : vector<4x240xf32>, vector<4x16xf32> -> vector<4x256xf32>
    %cst_27 = arith.constant 0.000000e+00 : f32
    %81 = vector.broadcast %cst_27 : f32 to vector<4x16xf32>
    %82 = vector.extract_strided_slice %65 {offsets = [0, 16], sizes = [4, 240], strides = [1, 1]} : vector<4x256xf32> to vector<4x240xf32>
    %83 = tpu.concatenate %82, %81 in 1 : vector<4x240xf32>, vector<4x16xf32> -> vector<4x256xf32>
    %84 = tpu.concatenate %68, %71, %74, %60, %55, %65, %77, %80, %83 in 0 : vector<4x256xf32>, vector<4x256xf32>, vector<4x256xf32>, vector<4x256xf32>, vector<4x256xf32>, vector<4x256xf32>, vector<4x256xf32>, vector<4x256xf32>, vector<4x256xf32> -> vector<36x256xf32>
    %c0_28 = arith.constant 0 : index
    %c0_29 = arith.constant 0 : index
    %85 = vector.load %arg4[%c0_28, %c0_29] : memref<4x36xf32, #tpu.memory_space<vmem>>, vector<4x36xf32>
    %cst_30 = arith.constant dense<0.000000e+00> : vector<4x256xf32>
    %86 = tpu.matmul %85, %84, %cst_30 {dimension_numbers = #tpu.dot_dimension_numbers<[1], [0], [0], [1], [0, 0, 1, 1], [], []>} : vector<4x36xf32>, vector<36x256xf32>, vector<4x256xf32> -> vector<4x256xf32>
    %cst_31 = arith.constant dense<0.000000e+00> : vector<4xf32>
    %87 = vector.multi_reduction <add>, %86, %cst_31 [1] : vector<4x256xf32> to vector<4xf32>
    %88 = vector.shape_cast %87 : vector<4xf32> to vector<4x1xf32>
    %89 = arith.mulf %86, %86 : vector<4x256xf32>
    %cst_32 = arith.constant dense<0.000000e+00> : vector<4xf32>
    %90 = vector.multi_reduction <add>, %89, %cst_32 [1] : vector<4x256xf32> to vector<4xf32>
    %91 = vector.shape_cast %90 : vector<4xf32> to vector<4x1xf32>
    %cst_33 = arith.constant 3.906250e-03 : f32
    %92 = vector.broadcast %cst_33 : f32 to vector<4x1xf32>
    %93 = arith.mulf %88, %92 : vector<4x1xf32>
    %cst_34 = arith.constant 3.906250e-03 : f32
    %94 = vector.broadcast %cst_34 : f32 to vector<4x1xf32>
    %95 = arith.mulf %91, %94 : vector<4x1xf32>
    %96 = arith.mulf %93, %93 : vector<4x1xf32>
    %97 = arith.subf %95, %96 : vector<4x1xf32>
    %98 = vector.broadcast %93 : vector<4x1xf32> to vector<4x256xf32>
    %99 = arith.subf %86, %98 : vector<4x256xf32>
    %cst_35 = arith.constant 9.99999974E-6 : f32
    %100 = vector.broadcast %cst_35 : f32 to vector<4x1xf32>
    %101 = arith.addf %97, %100 : vector<4x1xf32>
    %102 = math.rsqrt %101 : vector<4x1xf32>
    %103 = vector.broadcast %102 : vector<4x1xf32> to vector<4x256xf32>
    %104 = arith.mulf %99, %103 : vector<4x256xf32>
    %105 = arith.addf %1, %104 : vector<4x256xf32>
    %c0_36 = arith.constant 0 : index
    %c0_37 = arith.constant 0 : index
    %c0_38 = arith.constant 0 : index
    %106 = vector.load %arg5[%c0_36, %c0_37, %c0_38] : memref<1x4x256xf32, #tpu.memory_space<vmem>>, vector<1x4x256xf32>
    %107 = vector.shape_cast %106 : vector<1x4x256xf32> to vector<4x256xf32>
    %108 = vector.shape_cast %105 : vector<4x256xf32> to vector<1x4x256xf32>
    tpu.vector_store %arg5[%c0_36, %c0_37, %c0_38], %108 {strides = array<i32>} : memref<1x4x256xf32, #tpu.memory_space<vmem>>, vector<1x4x256xf32>,
    return
  }
  func.func @transform_0(%arg0: i32) -> (i32, i32, i32) {
    %c0_i32 = arith.constant 0 : i32
    %c0_i32_0 = arith.constant 0 : i32
    %c0_i32_1 = arith.constant 0 : i32
    return %arg0, %c0_i32, %c0_i32_0 : i32, i32, i32
  }
  func.func @transform_1(%arg0: i32) -> (i32, i32) {
    %c0_i32 = arith.constant 0 : i32
    %c0_i32_0 = arith.constant 0 : i32
    %c0_i32_1 = arith.constant 0 : i32
    return %c0_i32, %c0_i32_0 : i32, i32
  }
  func.func @transform_2(%arg0: i32) -> (i32, i32) {
    %c0_i32 = arith.constant 0 : i32
    %c0_i32_0 = arith.constant 0 : i32
    %c0_i32_1 = arith.constant 0 : i32
    return %c0_i32, %c0_i32_0 : i32, i32
  }
  func.func @transform_3(%arg0: i32) -> (i32, i32) {
    %c0_i32 = arith.constant 0 : i32
    %c0_i32_0 = arith.constant 0 : i32
    %c0_i32_1 = arith.constant 0 : i32
    return %c0_i32, %c0_i32_0 : i32, i32
  }
  func.func @transform_4(%arg0: i32) -> (i32, i32, i32) {
    %c0_i32 = arith.constant 0 : i32
    %c0_i32_0 = arith.constant 0 : i32
    %c0_i32_1 = arith.constant 0 : i32
    return %arg0, %c0_i32, %c0_i32_0 : i32, i32, i32
  }
}

</mosaic_0001>

<llo_original>
// kernel: rblock_forward.1
$region0: #{rblock_forward.1}
  #allocation0 [shape = 'u32[]', space=smem, size = 0x4, offset = 0x4, fixed_abs, tag = 'smem constant byte address 0x4 - core index']
  #allocation1 [shape = 'u32[144,128]{1,0:T(1,128)}', space=vmem, size = 0x12000, scoped, tag = 'internal scratch']
  %s0 = inlined_call_operand.vmem [shape: f32[2,4,256], index: 0, kind: input, shape index: {}]
  %s1 = inlined_call_operand.vmem [shape: f32[2,256], index: 1, kind: input, shape index: {}]
  %s2 = inlined_call_operand.vmem [shape: f32[4,36], index: 2, kind: input, shape index: {}]
  %s3 = inlined_call_operand.vmem [shape: f32[4,36], index: 3, kind: input, shape index: {}]
  %s4 = inlined_call_operand.vmem [shape: f32[2,4,256], index: 4, kind: output, shape index: {}]
  %s5 = sld [smem:[#allocation0]]
  $region49: #{rblock_forward.1} parent=0
    _
  %s7 = ssub.s32 1, %s5
  %s8 = scalar_select 0, %s7, %s5
  loop: start=0, step=1, limit=4
  $region2: #{rblock_forward.1} parent=0 // loop_pre_header
    _
  $region3: #{rblock_forward.1} parent=0 // loop_header
    %s10 = sphi 0, %s14
    %p11 = scmp.ge.s32.totalorder %s10, 4
    %s20 = sphi 0, %s22
    %s23 = sphi 0, %s20
    %s24 = sphi 0, %s23
    %s40 = sphi 0, %s24
    %s44 = sphi 0, %s44
    %s46 = sphi 0, %s44
    %s47 = sphi 0, %s46
    %s61 = sphi 0, %s47
    %s65 = sphi 0, %s65
    %s67 = sphi 0, %s65
    %s68 = sphi 0, %s67
    %s82 = sphi 0, %s68
    %s86 = sphi 0, %s86
    %s88 = sphi 0, %s86
    %s89 = sphi 0, %s88
    %s103 = sphi 0, %s89
    %s109 = sphi 0, %s111
    %s112 = sphi 0, %s109
    %s113 = sphi 0, %s112
    %s129 = sphi 0, %s113
  $region4: #{rblock_forward.1} parent=0 // loop_header_branch
    %13 = sbr.rel (%p11) target = $region8
  $region5: #{rblock_forward.1} parent=0 // loop_body
    %s15 = ssub.s32 %s10, 1
    %s16 = ssub.s32 %s10, 2
    %s17 = sadd.s32 %s10, 1
    %s18 = ssub.s32 %s10, %s17
    %p19 = scmp.eq.s32.totalorder %s18, 0
    %s21 = sadd.s32 %s20, 1
    %s22 = scalar_select %p19, %s20, %s21
    %p25 = pneg %p19
    %p26 = scmp.eq.s32.totalorder %s10, 1
    %p27 = por %p25, %p26
    %p28 = scmp.ne.s32.totalorder %s20, %s23
    %p29 = scmp.eq.s32.totalorder %s10, 0
    %p30 = por %p28, %p29
    %p31 = scmp.ne.s32.totalorder %s20, %s23
    %p32 = scmp.eq.s32.totalorder %s15, 1
    %p33 = por %p31, %p32
    %p34 = scmp.ne.s32.totalorder %s23, %s24
    %p35 = scmp.eq.s32.totalorder %s15, 0
    %p36 = por %p34, %p35
    %p37 = scmp.ne.s32.totalorder %s23, %s24
    %p38 = scmp.eq.s32.totalorder %s16, 1
    %p39 = por %p37, %p38
    %p41 = scmp.ne.s32.totalorder %s24, %s40
    %p42 = scmp.eq.s32.totalorder %s16, 0
    %p43 = por %p41, %p42
    %s45 = sadd.s32 %s44, 1
    %p48 = scmp.eq.s32.totalorder %s10, 1
    %p49 = scmp.ne.s32.totalorder %s44, %s46
    %p50 = scmp.eq.s32.totalorder %s10, 0
    %p51 = por %p49, %p50
    %p52 = scmp.ne.s32.totalorder %s44, %s46
    %p53 = scmp.eq.s32.totalorder %s15, 1
    %p54 = por %p52, %p53
    %p55 = scmp.ne.s32.totalorder %s46, %s47
    %p56 = scmp.eq.s32.totalorder %s15, 0
    %p57 = por %p55, %p56
    %p58 = scmp.ne.s32.totalorder %s46, %s47
    %p59 = scmp.eq.s32.totalorder %s16, 1
    %p60 = por %p58, %p59
    %p62 = scmp.ne.s32.totalorder %s47, %s61
    %p63 = scmp.eq.s32.totalorder %s16, 0
    %p64 = por %p62, %p63
    %s66 = sadd.s32 %s65, 1
    %p69 = scmp.eq.s32.totalorder %s10, 1
    %p70 = scmp.ne.s32.totalorder %s65, %s67
    %p71 = scmp.eq.s32.totalorder %s10, 0
    %p72 = por %p70, %p71
    %p73 = scmp.ne.s32.totalorder %s65, %s67
    %p74 = scmp.eq.s32.totalorder %s15, 1
    %p75 = por %p73, %p74
    %p76 = scmp.ne.s32.totalorder %s67, %s68
    %p77 = scmp.eq.s32.totalorder %s15, 0
    %p78 = por %p76, %p77
    %p79 = scmp.ne.s32.totalorder %s67, %s68
    %p80 = scmp.eq.s32.totalorder %s16, 1
    %p81 = por %p79, %p80
    %p83 = scmp.ne.s32.totalorder %s68, %s82
    %p84 = scmp.eq.s32.totalorder %s16, 0
    %p85 = por %p83, %p84
    %s87 = sadd.s32 %s86, 1
    %p90 = scmp.eq.s32.totalorder %s10, 1
    %p91 = scmp.ne.s32.totalorder %s86, %s88
    %p92 = scmp.eq.s32.totalorder %s10, 0
    %p93 = por %p91, %p92
    %p94 = scmp.ne.s32.totalorder %s86, %s88
    %p95 = scmp.eq.s32.totalorder %s15, 1
    %p96 = por %p94, %p95
    %p97 = scmp.ne.s32.totalorder %s88, %s89
    %p98 = scmp.eq.s32.totalorder %s15, 0
    %p99 = por %p97, %p98
    %p100 = scmp.ne.s32.totalorder %s88, %s89
    %p101 = scmp.eq.s32.totalorder %s16, 1
    %p102 = por %p100, %p101
    %p104 = scmp.ne.s32.totalorder %s89, %s103
    %p105 = scmp.eq.s32.totalorder %s16, 0
    %p106 = por %p104, %p105
    %s107 = ssub.s32 %s10, %s17
    %p108 = scmp.eq.s32.totalorder %s107, 0
    %s110 = sadd.s32 %s109, 1
    %s111 = scalar_select %p108, %s109, %s110
    %p114 = pneg %p108
    %p115 = scmp.eq.s32.totalorder %s10, 1
    %p116 = por %p114, %p115
    %p117 = scmp.ne.s32.totalorder %s109, %s112
    %p118 = scmp.eq.s32.totalorder %s10, 0
    %p119 = por %p117, %p118
    %p120 = scmp.ne.s32.totalorder %s109, %s112
    %p121 = scmp.eq.s32.totalorder %s15, 1
    %p122 = por %p120, %p121
    %p123 = scmp.ne.s32.totalorder %s112, %s113
    %p124 = scmp.eq.s32.totalorder %s15, 0
    %p125 = por %p123, %p124
    %p126 = scmp.ne.s32.totalorder %s112, %s113
    %p127 = scmp.eq.s32.totalorder %s16, 1
    %p128 = por %p126, %p127
    %p130 = scmp.ne.s32.totalorder %s113, %s129
    %p131 = scmp.eq.s32.totalorder %s16, 0
    %p132 = por %p130, %p131
    %p133 = scmp.le.s32.totalorder 1, %s10
    %p134 = scmp.lt.s32.totalorder %s10, 3
    %p135 = pnand %p133, %p134
    %p136 = pneg %p135
    // Predicated region
    $region9: #{rblock_forward.1} parent=5 // pred_check
      _
    $region10: #{rblock_forward.1} parent=5 // pred_check_branch
      %138 = sbr.rel (%p135) target = $region12
    $region11: #{rblock_forward.1} parent=5 // pred_region
      %s139 = ssub.s32 %s10, 1
      // Predicated region
      $region13: #{rblock_forward.1} parent=11 // pred_check
        %p140 = pneg %p57
      $region14: #{rblock_forward.1} parent=11 // pred_check_branch
        %142 = sbr.rel (%p140) target = $region16
      $region15: #{rblock_forward.1} parent=11 // pred_region
        _
      $region16: #{rblock_forward.1} parent=11 // pred_fallthru
        _
      // Predicated region
      $region17: #{rblock_forward.1} parent=11 // pred_check
        %p143 = pneg %p78
      $region18: #{rblock_forward.1} parent=11 // pred_check_branch
        %145 = sbr.rel (%p143) target = $region20
      $region19: #{rblock_forward.1} parent=11 // pred_region
        _
      $region20: #{rblock_forward.1} parent=11 // pred_fallthru
        _
      // Predicated region
      $region21: #{rblock_forward.1} parent=11 // pred_check
        %p146 = pneg %p99
      $region22: #{rblock_forward.1} parent=11 // pred_check_branch
        %148 = sbr.rel (%p146) target = $region24
      $region23: #{rblock_forward.1} parent=11 // pred_region
        _
      $region24: #{rblock_forward.1} parent=11 // pred_fallthru
        _
    $region12: #{rblock_forward.1} parent=5 // pred_fallthru
      _
    %p149 = scmp.lt.s32.totalorder %s10, 2
    // Predicated region
    $region25: #{rblock_forward.1} parent=5 // pred_check
      %p150 = pneg %p149
    $region26: #{rblock_forward.1} parent=5 // pred_check_branch
      %152 = sbr.rel (%p150) target = $region28
    $region27: #{rblock_forward.1} parent=5 // pred_region
      // Predicated region
      $region29: #{rblock_forward.1} parent=27 // pred_check
        %p153 = pneg %p30
      $region30: #{rblock_forward.1} parent=27 // pred_check_branch
        %155 = sbr.rel (%p153) target = $region32
      $region31: #{rblock_forward.1} parent=27 // pred_region
        %p156 = scmp.lt.s32.totalorder %s10, 1
        %s157 = scalar_select %p156, %s10, 1
        %s158 = smul.addr %s157, 2
        %s159 = smul.addr %s158, 4
        %s160 = scalar_lea.vmem %s0, %s159
      $region32: #{rblock_forward.1} parent=27 // pred_fallthru
        _
    $region28: #{rblock_forward.1} parent=5 // pred_fallthru
      _
    %p161 = scmp.le.s32.totalorder 1, %s10
    %p162 = scmp.lt.s32.totalorder %s10, 3
    %p163 = pnand %p161, %p162
    %p164 = pneg %p163
    // Predicated region
    $region33: #{rblock_forward.1} parent=5 // pred_check
      _
    $region34: #{rblock_forward.1} parent=5 // pred_check_branch
      %166 = sbr.rel (%p163) target = $region36
    $region35: #{rblock_forward.1} parent=5 // pred_region
      %s167 = ssub.s32 %s10, 1
      %p168 = scmp.lt.s32.totalorder %s15, 1
      %s169 = scalar_select %p168, %s15, 1
      %s170 = smul.addr %s169, 2
      %s171 = smul.addr %s170, 4
      %s172 = scalar_lea.vmem %s0, %s171
      %p173 = pneg %p36
      %p174 = pneg %p33
      %p175 = pneg %p57
      %p176 = pneg %p54
      %p177 = pneg %p78
      %p178 = pneg %p75
      %p179 = pneg %p99
      %p180 = pneg %p96
      %p181 = pneg %p125
      %p182 = pneg %p122
      %p183 = scmp.lt.s32.totalorder %s15, 1
      %s184 = scalar_select %p183, %s15, 1
      %s185 = smul.addr %s184, 2
      %s186 = smul.addr %s185, 4
      %s187 = scalar_lea.vmem %s4, %s186
      %p188 = scmp.lt.s32.totalorder %s15, 1
      %s189 = scalar_select %p188, %s15, 1
      %s190 = smul.addr %s189, 2
      %s191 = smul.addr %s190, 4
      %s192 = scalar_lea.vmem %s0, %s191
      %p193 = scmp.lt.s32.totalorder %s15, 1
      %s194 = scalar_select %p193, %s15, 1
      %s195 = smul.addr %s194, 2
      %s196 = smul.addr %s195, 4
      %s197 = scalar_lea.vmem %s4, %s196
      %v198 = vld [vmem:[%s192] sm:$0xff]
      %v199 = vld [vmem:[%s1] sm:$0xf]
      %v201 = vcombine.high %v198, %v198
      %202 = vrot.lane.b32.xlu0 %v198, 1
      %v203 = vpop.permute.xlu0 %202
      %204 = vrot.lane.b32.xlu0 %v201, 1
      %v205 = vpop.permute.xlu0 %204
      %vm206 = vcmask 7168
      %v207 = vsel %vm206, %v203, %v205
      %v210 = vsel %vm206, 0.0, %v203
      %v212 = vlaneseq
      %v213 = vshrl.u32 %v212, 7
      %v214 = vsub.s32 0, %v213
      %v215 = vrot.slane %v199, %v214
      %v216 = vlaneseq
      %v217 = vshrl.u32 %v216, 7
      %v218 = vsub.s32 2, %v217
      %v219 = vrot.slane %v199, %v218
      %v222 = vlaneseq
      %v223 = vshrl.u32 %v222, 7
      %v224 = vsub.s32 0, %v223
      %v225 = vrot.slane %v215, %v224
      %v226 = vlaneseq
      %v227 = vshrl.u32 %v226, 7
      %v228 = vsub.s32 0, %v227
      %v229 = vrot.slane %v219, %v228
      %v230 = vmul.f32 %v210, %v225
      %v231 = vmul.f32 %v207, %v229
      %232 = vrot.lane.b32.xlu0 %v198, 127
      %v233 = vpop.permute.xlu0 %232
      %234 = vrot.lane.b32.xlu0 %v201, 127
      %v235 = vpop.permute.xlu0 %234
      %vm236 = vcmask 1039360
      %v237 = vsel %vm236, %v233, %v235
      %v240 = vsel %vm236, %v235, 0.0
      %v241 = vlaneseq
      %v242 = vshrl.u32 %v241, 7
      %v243 = vsub.s32 1, %v242
      %v244 = vrot.slane %v199, %v243
      %v245 = vlaneseq
      %v246 = vshrl.u32 %v245, 7
      %v247 = vsub.s32 3, %v246
      %v248 = vrot.slane %v199, %v247
      %v251 = vlaneseq
      %v252 = vshrl.u32 %v251, 7
      %v253 = vsub.s32 1, %v252
      %v254 = vrot.slane %v244, %v253
      %v255 = vlaneseq
      %v256 = vshrl.u32 %v255, 7
      %v257 = vsub.s32 1, %v256
      %v258 = vrot.slane %v248, %v257
      %v259 = vmul.f32 %v237, %v254
      %v260 = vmul.f32 %v240, %v258
      %263 = vrot.lane.b32.xlu0 %v230, 16
      %v264 = vpop.permute.xlu0 %263
      %265 = vrot.lane.b32.xlu0 %v231, 16
      %v266 = vpop.permute.xlu0 %265
      %vm267 = vcmask 130048
      %v268 = vsel %vm267, %v264, %v266
      %v271 = vsel %vm267, 0.0, %v264
      %272 = vrot.lane.b32.xlu0 %v198, 16
      %v273 = vpop.permute.xlu0 %272
      %274 = vrot.lane.b32.xlu0 %v201, 16
      %v275 = vpop.permute.xlu0 %274
      %v276 = vsel %vm267, %v273, %v275
      %v278 = vsel %vm267, 0.0, %v273
      %281 = vrot.lane.b32.xlu0 %v259, 16
      %v282 = vpop.permute.xlu0 %281
      %283 = vrot.lane.b32.xlu0 %v260, 16
      %v284 = vpop.permute.xlu0 %283
      %v285 = vsel %vm267, %v282, %v284
      %v288 = vsel %vm267, 0.0, %v282
      %289 = vrot.lane.b32.xlu0 %v230, 112
      %v290 = vpop.permute.xlu0 %289
      %291 = vrot.lane.b32.xlu0 %v231, 112
      %v292 = vpop.permute.xlu0 %291
      %vm293 = vcmask 916480
      %v294 = vsel %vm293, %v290, %v292
      %v297 = vsel %vm293, %v292, 0.0
      %298 = vrot.lane.b32.xlu0 %v198, 112
      %v299 = vpop.permute.xlu0 %298
      %300 = vrot.lane.b32.xlu0 %v201, 112
      %v301 = vpop.permute.xlu0 %300
      %v302 = vsel %vm293, %v299, %v301
      %v304 = vsel %vm293, %v301, 0.0
      %305 = vrot.lane.b32.xlu0 %v259, 112
      %v306 = vpop.permute.xlu0 %305
      %307 = vrot.lane.b32.xlu0 %v260, 112
      %v308 = vpop.permute.xlu0 %307
      %v309 = vsel %vm293, %v306, %v308
      %v311 = vsel %vm293, %v308, 0.0
      %v313 = vrot.slane %v278, 4
      %v314 = vrot.slane %v276, 4
      %v317 = vrot.slane %v230, 4
      %v318 = vrot.slane %v231, 4
      %v322 = vrot.slane %v259, 4
      %v323 = vrot.slane %v260, 4
      %v327 = vrot.slane %v302, 4
      %v328 = vrot.slane %v304, 4
      %vm331 = vcmask 1043456
      %v332 = vsel %vm331, %v271, %v313
      %v333 = vsel %vm331, %v268, %v314
      %v334 = vsel %vm331, %v288, %v317
      %v335 = vsel %vm331, %v285, %v318
      %v336 = vsel %vm331, %v198, %v322
      %v337 = vsel %vm331, %v201, %v323
      %v338 = vsel %vm331, %v294, %v327
      %v339 = vsel %vm331, %v297, %v328
      %v340 = vld [vmem:[%s2] sm:$0xf]
      %vm341 = vcmask 293888
      %v343 = vsel %vm341, %v340, 0
      %v345 = vsel %vm331, %v309, 0
      %v348 = vsel %vm331, %v311, 0
      %350 = vmatprep.subr.mxu0 %v333
      %351 = vmatpush1.msra.mxu0 %v332
      %352 = vmatprep.subr.mxu0 %v335
      %353 = vmatpush1.msra.mxu0 %v334
      %354 = vmatprep.subr.mxu0 %v337
      %355 = vmatpush1.msra.mxu0 %v336
      %356 = vmatprep.subr.mxu0 %v339
      %357 = vmatpush1.msra.mxu0 %v338
      %358 = vmatprep.subr.mxu0 %v348
      %359 = vmatpush1.msra.mxu0 %v345
      %360 = vmatprep.subr.mxu0 0.0
      %361 = vmatpush1.msra.mxu0 0.0
      %362 = vmatprep.subr.mxu0 0.0
      %363 = vmatpush1.msra.mxu0 0.0
      %364 = vmatprep.subr.mxu0 0.0
      %365 = vmatpush1.msra.mxu0 0.0
      %366 = vmatprep.subr.mxu0 0.0
      %367 = vmatpush1.msra.mxu0 0.0
      %368 = vmatprep.subr.mxu0 0.0
      %369 = vmatpush1.msra.mxu0 0.0
      %370 = vmatprep.subr.mxu0 0.0
      %371 = vmatpush1.msra.mxu0 0.0
      %372 = vmatprep.subr.mxu0 0.0
      %373 = vmatpush1.msra.mxu0 0.0
      %374 = vmatprep.subr.mxu0 0.0
      %375 = vmatpush1.msra.mxu0 0.0
      %376 = vmatprep.subr.mxu0 0.0
      %377 = vmatpush1.msra.mxu0 0.0
      %378 = vmatprep.subr.mxu0 0.0
      %379 = vmatpush1.msra.mxu0 0.0
      %380 = vmatprep.subr.mxu0 0.0
      %381 = vmatpush1.msra.mxu0 0.0
      %382 = vmatprep.subr.mxu0 0.0
      %383 = vmatpush1.msra.mxu0 0.0
      %384 = vmatprep.subr.mxu0 0.0
      %385 = vmatpush1.msra.mxu0 0.0
      %386 = vmatprep.subr.mxu0 0.0
      %387 = vmatpush1.msra.mxu0 0.0
      %388 = vmatprep.subr.mxu0 0.0
      %389 = vmatpush1.msra.mxu0 0.0
      %390 = vmatprep.subr.mxu0 0.0
      %391 = vmatpush1.msra.mxu0 0.0
      %392 = vmatprep.subr.mxu0 0.0
      %393 = vmatpush1.msra.mxu0 0.0
      %394 = vmatprep.subr.mxu0 0.0
      %395 = vmatpush1.msra.mxu0 0.0
      %396 = vmatprep.subr.mxu0 0.0
      %397 = vmatpush1.msra.mxu0 0.0
      %398 = vmatprep.subr.mxu0 0.0
      %399 = vmatpush1.msra.mxu0 0.0
      %400 = vmatprep.subr.mxu0 0.0
      %401 = vmatpush1.msra.mxu0 0.0
      %402 = vmatprep.subr.mxu0 0.0
      %403 = vmatpush1.msra.mxu0 0.0
      %404 = vmatprep.subr.mxu0 0.0
      %405 = vmatpush1.msra.mxu0 0.0
      %406 = vmatprep.subr.mxu0 0.0
      %407 = vmatpush1.msra.mxu0 0.0
      %408 = vmatprep.subr.mxu0 0.0
      %409 = vmatpush1.msra.mxu0 0.0
      %410 = vmatprep.subr.mxu0 0.0
      %411 = vmatpush1.msra.mxu0 0.0
      %412 = vmatprep.subr.mxu0 0.0
      %413 = vmatpush1.msra.mxu0 0.0
      %414 = vmatprep.mubr.f32.mxu0 0.0
      %415 = vmatmul.mubr.f32.gmra.mrb[0].mxu0 %v343
      %v416 = vpop.f32.mrb[0].mxu0
      %v417 = vadd.f32 0.0, %v416
      %v418 = vpop.f32.mrb[0].mxu0
      %v419 = vadd.f32 0.0, %v418
      %420 = vdwg.mxu0
      %v421 = vsel %vm331, %v417, 0.0
      %v422 = vsel %vm331, %v419, 0.0
      %v423 = vadd.f32 %v421, %v422
      %424 = vadd.xlane.f32.xlu0 %v423
      %v425 = vpop.xlane.xlu0 %424
      %v426 = vmul.f32 %v417, %v417
      %v427 = vmul.f32 %v419, %v419
      %v428 = vsel %vm331, %v426, 0.0
      %v429 = vsel %vm331, %v427, 0.0
      %v430 = vadd.f32 %v428, %v429
      %431 = vadd.xlane.f32.xlu0 %v430
      %v432 = vpop.xlane.xlu0 %431
      %v433 = vmul.f32 %v425, 0.00390625
      %v434 = vmul.f32 %v432, 0.00390625
      %v435 = vmul.f32 %v433, %v433
      %v436 = vsub.f32 %v434, %v435
      %v437 = vsub.f32 %v417, %v433
      %v438 = vsub.f32 %v419, %v433
      %v439 = vadd.f32 %v436, 1e-05
      %v440 = vrsqrt.pop %v439
      %v441 = vmul.f32 %v437, %v440
      %v442 = vmul.f32 %v438, %v440
      %v443 = vmax.f32 %v441, 0.0
      %v444 = vmax.f32 %v442, 0.0
      %447 = vrot.lane.b32.xlu0 %v443, 1
      %v448 = vpop.permute.xlu0 %447
      %449 = vrot.lane.b32.xlu0 %v444, 1
      %v450 = vpop.permute.xlu0 %449
      %v451 = vsel %vm206, %v448, %v450
      %v454 = vsel %vm206, 0.0, %v448
      %v455 = vmul.f32 %v454, %v225
      %v456 = vmul.f32 %v451, %v229
      %457 = vrot.lane.b32.xlu0 %v443, 127
      %v458 = vpop.permute.xlu0 %457
      %459 = vrot.lane.b32.xlu0 %v444, 127
      %v460 = vpop.permute.xlu0 %459
      %v461 = vsel %vm236, %v458, %v460
      %v464 = vsel %vm236, %v460, 0.0
      %v465 = vmul.f32 %v461, %v254
      %v466 = vmul.f32 %v464, %v258
      %469 = vrot.lane.b32.xlu0 %v455, 16
      %v470 = vpop.permute.xlu0 %469
      %471 = vrot.lane.b32.xlu0 %v456, 16
      %v472 = vpop.permute.xlu0 %471
      %v473 = vsel %vm267, %v470, %v472
      %v476 = vsel %vm267, 0.0, %v470
      %477 = vrot.lane.b32.xlu0 %v443, 16
      %v478 = vpop.permute.xlu0 %477
      %479 = vrot.lane.b32.xlu0 %v444, 16
      %v480 = vpop.permute.xlu0 %479
      %v481 = vsel %vm267, %v478, %v480
      %v483 = vsel %vm267, 0.0, %v478
      %486 = vrot.lane.b32.xlu0 %v465, 16
      %v487 = vpop.permute.xlu0 %486
      %488 = vrot.lane.b32.xlu0 %v466, 16
      %v489 = vpop.permute.xlu0 %488
      %v490 = vsel %vm267, %v487, %v489
      %v493 = vsel %vm267, 0.0, %v487
      %494 = vrot.lane.b32.xlu0 %v455, 112
      %v495 = vpop.permute.xlu0 %494
      %496 = vrot.lane.b32.xlu0 %v456, 112
      %v497 = vpop.permute.xlu0 %496
      %v498 = vsel %vm293, %v495, %v497
      %v501 = vsel %vm293, %v497, 0.0
      %502 = vrot.lane.b32.xlu0 %v443, 112
      %v503 = vpop.permute.xlu0 %502
      %504 = vrot.lane.b32.xlu0 %v444, 112
      %v505 = vpop.permute.xlu0 %504
      %v506 = vsel %vm293, %v503, %v505
      %v508 = vsel %vm293, %v505, 0.0
      %509 = vrot.lane.b32.xlu0 %v465, 112
      %v510 = vpop.permute.xlu0 %509
      %511 = vrot.lane.b32.xlu0 %v466, 112
      %v512 = vpop.permute.xlu0 %511
      %v513 = vsel %vm293, %v510, %v512
      %v515 = vsel %vm293, %v512, 0.0
      %v517 = vrot.slane %v483, 4
      %v518 = vrot.slane %v481, 4
      %v521 = vrot.slane %v455, 4
      %v522 = vrot.slane %v456, 4
      %v525 = vrot.slane %v465, 4
      %v526 = vrot.slane %v466, 4
      %v530 = vrot.slane %v506, 4
      %v531 = vrot.slane %v508, 4
      %v534 = vsel %vm331, %v476, %v517
      %v535 = vsel %vm331, %v473, %v518
      %v536 = vsel %vm331, %v493, %v521
      %v537 = vsel %vm331, %v490, %v522
      %v538 = vsel %vm331, %v443, %v525
      %v539 = vsel %vm331, %v444, %v526
      %v540 = vsel %vm331, %v498, %v530
      %v541 = vsel %vm331, %v501, %v531
      %v542 = vld [vmem:[%s3] sm:$0xf]
      %v544 = vsel %vm341, %v542, 0
      %v546 = vsel %vm331, %v513, 0
      %v549 = vsel %vm331, %v515, 0
      %551 = vmatprep.subr.mxu0 %v535
      %552 = vmatpush1.msra.mxu0 %v534
      %553 = vmatprep.subr.mxu0 %v537
      %554 = vmatpush1.msra.mxu0 %v536
      %555 = vmatprep.subr.mxu0 %v539
      %556 = vmatpush1.msra.mxu0 %v538
      %557 = vmatprep.subr.mxu0 %v541
      %558 = vmatpush1.msra.mxu0 %v540
      %559 = vmatprep.subr.mxu0 %v549
      %560 = vmatpush1.msra.mxu0 %v546
      %561 = vmatprep.subr.mxu0 0.0
      %562 = vmatpush1.msra.mxu0 0.0
      %563 = vmatprep.subr.mxu0 0.0
      %564 = vmatpush1.msra.mxu0 0.0
      %565 = vmatprep.subr.mxu0 0.0
      %566 = vmatpush1.msra.mxu0 0.0
      %567 = vmatprep.subr.mxu0 0.0
      %568 = vmatpush1.msra.mxu0 0.0
      %569 = vmatprep.subr.mxu0 0.0
      %570 = vmatpush1.msra.mxu0 0.0
      %571 = vmatprep.subr.mxu0 0.0
      %572 = vmatpush1.msra.mxu0 0.0
      %573 = vmatprep.subr.mxu0 0.0
      %574 = vmatpush1.msra.mxu0 0.0
      %575 = vmatprep.subr.mxu0 0.0
      %576 = vmatpush1.msra.mxu0 0.0
      %577 = vmatprep.subr.mxu0 0.0
      %578 = vmatpush1.msra.mxu0 0.0
      %579 = vmatprep.subr.mxu0 0.0
      %580 = vmatpush1.msra.mxu0 0.0
      %581 = vmatprep.subr.mxu0 0.0
      %582 = vmatpush1.msra.mxu0 0.0
      %583 = vmatprep.subr.mxu0 0.0
      %584 = vmatpush1.msra.mxu0 0.0
      %585 = vmatprep.subr.mxu0 0.0
      %586 = vmatpush1.msra.mxu0 0.0
      %587 = vmatprep.subr.mxu0 0.0
      %588 = vmatpush1.msra.mxu0 0.0
      %589 = vmatprep.subr.mxu0 0.0
      %590 = vmatpush1.msra.mxu0 0.0
      %591 = vmatprep.subr.mxu0 0.0
      %592 = vmatpush1.msra.mxu0 0.0
      %593 = vmatprep.subr.mxu0 0.0
      %594 = vmatpush1.msra.mxu0 0.0
      %595 = vmatprep.subr.mxu0 0.0
      %596 = vmatpush1.msra.mxu0 0.0
      %597 = vmatprep.subr.mxu0 0.0
      %598 = vmatpush1.msra.mxu0 0.0
      %599 = vmatprep.subr.mxu0 0.0
      %600 = vmatpush1.msra.mxu0 0.0
      %601 = vmatprep.subr.mxu0 0.0
      %602 = vmatpush1.msra.mxu0 0.0
      %603 = vmatprep.subr.mxu0 0.0
      %604 = vmatpush1.msra.mxu0 0.0
      %605 = vmatprep.subr.mxu0 0.0
      %606 = vmatpush1.msra.mxu0 0.0
      %607 = vmatprep.subr.mxu0 0.0
      %608 = vmatpush1.msra.mxu0 0.0
      %609 = vmatprep.subr.mxu0 0.0
      %610 = vmatpush1.msra.mxu0 0.0
      %611 = vmatprep.subr.mxu0 0.0
      %612 = vmatpush1.msra.mxu0 0.0
      %613 = vmatprep.subr.mxu0 0.0
      %614 = vmatpush1.msra.mxu0 0.0
      %615 = vmatprep.mubr.f32.mxu0 0.0
      %616 = vmatmul.mubr.f32.gmra.mrb[0].mxu0 %v544
      %v617 = vpop.f32.mrb[0].mxu0
      %v618 = vadd.f32 0.0, %v617
      %v619 = vpop.f32.mrb[0].mxu0
      %v620 = vadd.f32 0.0, %v619
      %621 = vdwg.mxu0
      %v622 = vsel %vm331, %v618, 0.0
      %v623 = vsel %vm331, %v620, 0.0
      %v624 = vadd.f32 %v622, %v623
      %625 = vadd.xlane.f32.xlu0 %v624
      %v626 = vpop.xlane.xlu0 %625
      %v627 = vmul.f32 %v618, %v618
      %v628 = vmul.f32 %v620, %v620
      %v629 = vsel %vm331, %v627, 0.0
      %v630 = vsel %vm331, %v628, 0.0
      %v631 = vadd.f32 %v629, %v630
      %632 = vadd.xlane.f32.xlu0 %v631
      %v633 = vpop.xlane.xlu0 %632
      %v634 = vmul.f32 %v626, 0.00390625
      %v635 = vmul.f32 %v633, 0.00390625
      %v636 = vmul.f32 %v634, %v634
      %v637 = vsub.f32 %v635, %v636
      %v638 = vsub.f32 %v618, %v634
      %v639 = vsub.f32 %v620, %v634
      %v640 = vadd.f32 %v637, 1e-05
      %v641 = vrsqrt.pop %v640
      %v642 = vmul.f32 %v638, %v641
      %v643 = vmul.f32 %v639, %v641
      %v646 = vcombine.low %v642, %v643
      %v648 = vadd.f32 %v198, %v646
      %649 = vst [vmem:[%s197] sm:$0xff] %v648
      %p650 = scmp.lt.s32.totalorder %s15, 1
      %s651 = scalar_select %p650, %s15, 1
      %s652 = smul.addr %s651, 2
      %s653 = smul.addr %s652, 4
      %s654 = scalar_lea.vmem %s4, %s653
      // Predicated region
      $region37: #{rblock_forward.1} parent=35 // pred_check
        %p655 = pneg %p122
      $region38: #{rblock_forward.1} parent=35 // pred_check_branch
        %657 = sbr.rel (%p655) target = $region40
      $region39: #{rblock_forward.1} parent=35 // pred_region
        _
      $region40: #{rblock_forward.1} parent=35 // pred_fallthru
        _
    $region36: #{rblock_forward.1} parent=5 // pred_fallthru
      _
    %p658 = scmp.le.s32.totalorder 2, %s10
    // Predicated region
    $region41: #{rblock_forward.1} parent=5 // pred_check
      %p659 = pneg %p658
    $region42: #{rblock_forward.1} parent=5 // pred_check_branch
      %661 = sbr.rel (%p659) target = $region44
    $region43: #{rblock_forward.1} parent=5 // pred_region
      %s662 = ssub.s32 %s10, 2
      // Predicated region
      $region45: #{rblock_forward.1} parent=43 // pred_check
        %p663 = pneg %p128
      $region46: #{rblock_forward.1} parent=43 // pred_check_branch
        %665 = sbr.rel (%p663) target = $region48
      $region47: #{rblock_forward.1} parent=43 // pred_region
        %p666 = scmp.lt.s32.totalorder %s16, 1
        %s667 = scalar_select %p666, %s16, 1
        %s668 = smul.addr %s667, 2
        %s669 = smul.addr %s668, 4
        %s670 = scalar_lea.vmem %s4, %s669
      $region48: #{rblock_forward.1} parent=43 // pred_fallthru
        _
    $region44: #{rblock_forward.1} parent=5 // pred_fallthru
      _
  $region6: #{rblock_forward.1} parent=0 // loop_footer
    %s14 = sadd.s32 1, %s10
  $region7: #{rblock_forward.1} parent=0 // loop_footer_branch
    %9 = sbr.rel target = $region3
  $region8: #{rblock_forward.1} parent=0 // loop_exit
    _

</llo_original>
